<compile_context>
chip_gen: v7x
topology: tpu7x:2x2x1
jax: 0.10.0
libtpu: 0.0.40
codegen_flags: <defaults>
</compile_context>

<pallas_src>
import functools

import jax
import jax.numpy as jnp
from jax import lax
from jax.experimental import pallas as pl
from jax.experimental.pallas import tpu as pltpu


# ---------------------------------------------------------------------------
# Tiling helpers
# ---------------------------------------------------------------------------
def _vmem_capacity_bytes():
    try:
        return int(pltpu.get_tpu_info().vmem_capacity_bytes)
    except Exception:
        return 64 << 20          # conservative fallback (v7x per-TC VMEM)


def _sublane_multiple(dtype):
    # f32 -> 8, bf16/f16 -> 16, int8/fp8 -> 32 (sublane packing of the tile).
    return max(8, 8 * (4 // max(1, dtype.itemsize)))


def _choose_tm(mp, L, itemsize, sub, budget_bytes):
    """Largest row tile whose double-buffered inputs (+ f32 temps) fit the
    budget, preferring a tm that divides mp so the tail mask compiles out."""
    bytes_per_row = L * (4 * itemsize + 8)     # 2 inputs x 2 bufs + ~2 f32 temps
    cap_rows = max(sub, budget_bytes // max(1, bytes_per_row))
    cap_rows = min(cap_rows, 2048)
    if mp <= cap_rows:
        return mp, True                        # whole partition in one block
    cap_rows = max(sub, (cap_rows // sub) * sub)
    for tm in range(cap_rows, sub - 1, -sub):  # prefer an exact divisor
        if mp % tm == 0:
            return tm, True
    return cap_rows, False                     # masked tail fallback


# ---------------------------------------------------------------------------
# Pallas kernel
# ---------------------------------------------------------------------------
def _make_kernel(*, tm, mp, exact, use_w, w_resident):
    def kernel(*refs):
        if use_w:
            pred_ref, gt_ref, w_ref, o_ref = refs
        else:
            pred_ref, gt_ref, o_ref = refs
        i = pl.program_id(1)                      # reduction (row-block) axis

        @pl.when(i == 0)
        def _init():
            o_ref[...] = jnp.zeros_like(o_ref)    # output block is the accumulator

        # Inputs stream HBM in native dtype; cast per-tile on the VPU.
        d = pred_ref[0].astype(jnp.float32) - gt_ref[0].astype(jnp.float32)

        if use_w:
            if w_resident and tm != mp:
                start = pl.multiple_of(i * tm, 8)
                w = w_ref[0, pl.ds(start, tm), :]     # resident weight, sliced
            else:
                w = w_ref[0]                          # (tm, 1) block / full partition
            d = d * w.astype(jnp.float32)             # lane-broadcast

        if not exact:                                 # compiled out when tm | mp
            rows = i * tm + lax.broadcasted_iota(jnp.int32, (tm, 1), 0)
            d = jnp.where(rows < mp, d, 0.0)

        sq = d * d                                    # (tm, L) f32

        if tm % 8 == 0:
            # Fold the tile's tm/8 sublane groups with pure VPU adds into the
            # resident (8, L) per-lane accumulator; cross-lane reduce happens
            # once, in the wrapper, on the tiny (P, 8, L) result.
            part = sq[0:8, :]
            for r in range(1, tm // 8):
                part = part + sq[8 * r:8 * (r + 1), :]
            o_ref[0, :, :] += part
        else:   # tiny, non-8-multiple partitions only
            o_ref[0, 0:1, :] += jnp.sum(sq, axis=0, keepdims=True)

    return kernel


# ---------------------------------------------------------------------------
# Wrapper
# ---------------------------------------------------------------------------
def joints_mse_loss(output, target, target_weight, *, use_target_weight=True):
    """output/target: (B, K, *spatial); target_weight: (B, K, 1)."""
    B, K = output.shape[0], output.shape[1]
    L = 1
    for s in output.shape[2:]:
        L *= s
    M = B * K

    # Partition rows across TensorCores (v7x has 2; harmless elsewhere).
    P = 2 if (M % 2 == 0 and M >= 16) else 1
    Mp = M // P

    pred = output.reshape(P, Mp, L)       # free reshapes, native dtype
    gt = target.reshape(P, Mp, L)

    itemsize = max(output.dtype.itemsize, target.dtype.itemsize)
    sub = _sublane_multiple(output.dtype)
    vmem_cap = _vmem_capacity_bytes()
    budget = max(8 << 20, vmem_cap // 2 - (4 << 20))
    tm, exact = _choose_tm(Mp, L, itemsize, sub, budget)
    nsteps = pl.cdiv(Mp, tm)

    # Each per-joint MSE averages over B*H*W elements (matches the given module).
    # TODO(synk): canonical HRNet JointsMSELoss adds 0.5* and /num_joints; the
    # provided module does neither, so we match the provided module.
    inv_denom = 1.0 / float(B * L)

    in_specs = [pl.BlockSpec((1, tm, L), lambda p, i: (p, i, 0)),
                pl.BlockSpec((1, tm, L), lambda p, i: (p, i, 0))]
    operands = [pred, gt]
    w_bytes = 0
    w_resident = False
    if use_target_weight:
        w3 = target_weight.reshape(P, Mp, 1)
        operands.append(w3)
        w_resident = exact and (Mp <= 4096)     # keep padded VMEM copy small
        if w_resident:
            in_specs.append(pl.BlockSpec((1, Mp, 1), lambda p, i: (p, 0, 0)))
        else:
            in_specs.append(pl.BlockSpec((1, tm, 1), lambda p, i: (p, i, 0)))
        w_bytes = M * target_weight.dtype.itemsize

    kernel = _make_kernel(tm=tm, mp=Mp, exact=exact,
                          use_w=use_target_weight, w_resident=w_resident)

    in_block_bytes = 2 * 2 * tm * L * itemsize          # pred+gt, double-buffered
    vmem_limit = int(min(vmem_cap - (8 << 20),
                         in_block_bytes + 2 * tm * L * 4 + (24 << 20)))
    vmem_limit = max(vmem_limit, 32 << 20)

    cost = pl.CostEstimate(
        flops=M * L * (4 if use_target_weight else 3),
        transcendentals=0,
        bytes_accessed=2 * M * L * itemsize + w_bytes + P * 8 * L * 4)

    partials = pl.pallas_call(
        kernel,
        out_shape=jax.ShapeDtypeStruct((P, 8, L), jnp.float32),
        grid=(P, nsteps),
        in_specs=in_specs,
        out_specs=pl.BlockSpec((1, 8, L), lambda p, i: (p, 0, 0)),
        compiler_params=pltpu.CompilerParams(
            dimension_semantics=("parallel", "arbitrary"),
            vmem_limit_bytes=vmem_limit),
        cost_estimate=cost,
    )(*operands)

    return jnp.sum(partials) * jnp.float32(inv_denom)


# ---------------------------------------------------------------------------
# Pure-JAX reference (mirrors the PyTorch per-joint loop exactly)
# ---------------------------------------------------------------------------
def joints_mse_loss_ref(output, target, target_weight, *, use_target_weight=True):
    B, K = output.shape[0], output.shape[1]
    pred = output.reshape(B, K, -1).astype(jnp.float32)
    gt = target.reshape(B, K, -1).astype(jnp.float32)
    loss = jnp.float32(0.0)
    for j in range(K):
        p = pred[:, j, :]
        g = gt[:, j, :]
        if use_target_weight:
            wj = target_weight[:, j].astype(jnp.float32)   # (B, 1) broadcast
            p = p * wj
            g = g * wj
        loss = loss + jnp.mean((p - g) ** 2)
    return loss


# ---------------------------------------------------------------------------
if __name__ == "__main__":
    key = jax.random.PRNGKey(0)
    k1, k2, k3 = jax.random.split(key, 3)

    # Small shapes consistent with the module: (batch, joints, heatmap H, W)
    B, K, H, W = 2, 16, 16, 16
    output = jax.random.normal(k1, (B, K, H, W), jnp.float32)
    target = jax.random.normal(k2, (B, K, H, W), jnp.float32)
    target_weight = jax.random.uniform(k3, (B, K, 1), jnp.float32)

    # use_target_weight=True path (f32 inputs)
    fn_w = jax.jit(functools.partial(joints_mse_loss, use_target_weight=True))
    loss_w = jax.block_until_ready(fn_w(output, target, target_weight))
    ref_w = joints_mse_loss_ref(output, target, target_weight,
                                use_target_weight=True)
    assert loss_w.shape == ()
    assert bool(jnp.isfinite(loss_w))
    assert bool(jnp.allclose(loss_w, ref_w, rtol=1e-5, atol=1e-5)), (loss_w, ref_w)

    # use_target_weight=False path (weight tensor is not even streamed)
    fn_nw = jax.jit(functools.partial(joints_mse_loss, use_target_weight=False))
    loss_nw = jax.block_until_ready(fn_nw(output, target, target_weight))
    ref_nw = joints_mse_loss_ref(output, target, target_weight,
                                 use_target_weight=False)
    assert bool(jnp.allclose(loss_nw, ref_nw, rtol=1e-5, atol=1e-5)), (loss_nw, ref_nw)

    # bf16 activations stream natively into the kernel (no wrapper upcast).
    loss_bf16 = jax.block_until_ready(
        fn_w(output.astype(jnp.bfloat16), target.astype(jnp.bfloat16),
             target_weight))
    assert bool(jnp.allclose(loss_bf16, ref_w, rtol=3e-2, atol=3e-2)), (loss_bf16, ref_w)

    print("KERNEL_OK")
</pallas_src>

<mosaic_0001>
module attributes {stable_mosaic.version = 11 : i64} {
  func.func @kernel(%arg0: i32, %arg1: i32, %arg2: memref<1x16x256xf32, #tpu.memory_space<vmem>>, %arg3: memref<1x16x256xf32, #tpu.memory_space<vmem>>, %arg4: memref<1x16x1xf32, #tpu.memory_space<vmem>>, %arg5: memref<1x8x256xf32, #tpu.memory_space<vmem>>) attributes {dimension_semantics = [#tpu.dimension_semantics<parallel>, #tpu.dimension_semantics<arbitrary>], iteration_bounds = array<i64: 2, 1>, scalar_prefetch = 0 : i64, scratch_operands = 0 : i64, tpu.core_type = #tpu.core_type<tc>, window_params = [{transform_indices = @transform_0, window_bounds = array<i64: 1, 16, 256>}, {transform_indices = @transform_1, window_bounds = array<i64: 1, 16, 256>}, {transform_indices = @transform_2, window_bounds = array<i64: 1, 16, 1>}, {transform_indices = @transform_3, window_bounds = array<i64: 1, 8, 256>}]} {
    %c0_i32 = arith.constant 0 : i32
    %0 = arith.cmpi eq, %arg1, %c0_i32 : i32
    %1 = arith.extui %0 : i1 to i32
    %c0_i32_0 = arith.constant 0 : i32
    %2 = arith.cmpi ne, %1, %c0_i32_0 : i32
    scf.if %2 {
      %cst = arith.constant 0.000000e+00 : f32
      %22 = vector.broadcast %cst : f32 to vector<1x8x256xf32>
      %c0_15 = arith.constant 0 : index
      %c0_16 = arith.constant 0 : index
      %c0_17 = arith.constant 0 : index
      %23 = vector.load %arg5[%c0_15, %c0_16, %c0_17] : memref<1x8x256xf32, #tpu.memory_space<vmem>>, vector<1x8x256xf32>
      tpu.vector_store %arg5[%c0_15, %c0_16, %c0_17], %22 {strides = array<i32>} : memref<1x8x256xf32, #tpu.memory_space<vmem>>, vector<1x8x256xf32>,
    } else {
    }
    %c0 = arith.constant 0 : index
    %c0_1 = arith.constant 0 : index
    %c0_2 = arith.constant 0 : index
    %3 = vector.load %arg2[%c0, %c0_1, %c0_2] : memref<1x16x256xf32, #tpu.memory_space<vmem>>, vector<1x16x256xf32>
    %4 = vector.shape_cast %3 : vector<1x16x256xf32> to vector<16x256xf32>
    %c0_3 = arith.constant 0 : index
    %c0_4 = arith.constant 0 : index
    %c0_5 = arith.constant 0 : index
    %5 = vector.load %arg3[%c0_3, %c0_4, %c0_5] : memref<1x16x256xf32, #tpu.memory_space<vmem>>, vector<1x16x256xf32>
    %6 = vector.shape_cast %5 : vector<1x16x256xf32> to vector<16x256xf32>
    %7 = arith.subf %4, %6 : vector<16x256xf32>
    %c0_6 = arith.constant 0 : index
    %c0_7 = arith.constant 0 : index
    %c0_8 = arith.constant 0 : index
    %8 = vector.load %arg4[%c0_6, %c0_7, %c0_8] : memref<1x16x1xf32, #tpu.memory_space<vmem>>, vector<1x16x1xf32>
    %9 = vector.shape_cast %8 : vector<1x16x1xf32> to vector<16x1xf32>
    %10 = vector.broadcast %9 : vector<16x1xf32> to vector<16x256xf32>
    %11 = arith.mulf %7, %10 : vector<16x256xf32>
    %12 = arith.mulf %11, %11 : vector<16x256xf32>
    %13 = vector.extract_strided_slice %12 {offsets = [0, 0], sizes = [8, 256], strides = [1, 1]} : vector<16x256xf32> to vector<8x256xf32>
    %14 = vector.extract_strided_slice %12 {offsets = [8, 0], sizes = [8, 256], strides = [1, 1]} : vector<16x256xf32> to vector<8x256xf32>
    %15 = arith.addf %13, %14 : vector<8x256xf32>
    %c0_9 = arith.constant 0 : index
    %c0_10 = arith.constant 0 : index
    %c0_11 = arith.constant 0 : index
    %16 = vector.load %arg5[%c0_9, %c0_10, %c0_11] : memref<1x8x256xf32, #tpu.memory_space<vmem>>, vector<1x8x256xf32>
    %17 = vector.shape_cast %16 : vector<1x8x256xf32> to vector<8x256xf32>
    %18 = arith.addf %17, %15 : vector<8x256xf32>
    %c0_12 = arith.constant 0 : index
    %c0_13 = arith.constant 0 : index
    %c0_14 = arith.constant 0 : index
    %19 = vector.load %arg5[%c0_12, %c0_13, %c0_14] : memref<1x8x256xf32, #tpu.memory_space<vmem>>, vector<1x8x256xf32>
    %20 = vector.shape_cast %19 : vector<1x8x256xf32> to vector<8x256xf32>
    %21 = vector.shape_cast %18 : vector<8x256xf32> to vector<1x8x256xf32>
    tpu.vector_store %arg5[%c0_12, %c0_13, %c0_14], %21 {strides = array<i32>} : memref<1x8x256xf32, #tpu.memory_space<vmem>>, vector<1x8x256xf32>,
    return
  }
  func.func @transform_0(%arg0: i32, %arg1: i32) -> (i32, i32, i32) {
    %c0_i32 = arith.constant 0 : i32
    %c0_i32_0 = arith.constant 0 : i32
    return %arg0, %arg1, %c0_i32 : i32, i32, i32
  }
  func.func @transform_1(%arg0: i32, %arg1: i32) -> (i32, i32, i32) {
    %c0_i32 = arith.constant 0 : i32
    %c0_i32_0 = arith.constant 0 : i32
    return %arg0, %arg1, %c0_i32 : i32, i32, i32
  }
  func.func @transform_2(%arg0: i32, %arg1: i32) -> (i32, i32, i32) {
    %c0_i32 = arith.constant 0 : i32
    %c0_i32_0 = arith.constant 0 : i32
    %c0_i32_1 = arith.constant 0 : i32
    return %arg0, %c0_i32, %c0_i32_0 : i32, i32, i32
  }
  func.func @transform_3(%arg0: i32, %arg1: i32) -> (i32, i32, i32) {
    %c0_i32 = arith.constant 0 : i32
    %c0_i32_0 = arith.constant 0 : i32
    %c0_i32_1 = arith.constant 0 : i32
    return %arg0, %c0_i32, %c0_i32_0 : i32, i32, i32
  }
}

</mosaic_0001>

<llo_original>
// kernel: joints_mse_loss.1
$region0: #{joints_mse_loss.1}
  #allocation0 [shape = 'u32[]', space=smem, size = 0x4, offset = 0x4, fixed_abs, tag = 'smem constant byte address 0x4 - core index']
  #allocation1 [shape = 'u32[144,128]{1,0:T(1,128)}', space=vmem, size = 0x12000, scoped, tag = 'internal scratch']
  %s0 = inlined_call_operand.vmem [shape: f32[2,16,256], index: 0, kind: input, shape index: {}]
  %s1 = inlined_call_operand.vmem [shape: f32[2,16,256], index: 1, kind: input, shape index: {}]
  %s2 = inlined_call_operand.vmem [shape: f32[2,16,1], index: 2, kind: input, shape index: {}]
  %s3 = inlined_call_operand.vmem [shape: f32[2,8,256], index: 3, kind: output, shape index: {}]
  %s4 = sld [smem:[#allocation0]]
  $region49: #{joints_mse_loss.1} parent=0
    _
  %s6 = ssub.s32 1, %s4
  %s7 = scalar_select 0, %s6, %s4
  loop: start=0, step=1, limit=4
  $region2: #{joints_mse_loss.1} parent=0 // loop_pre_header
    _
  $region3: #{joints_mse_loss.1} parent=0 // loop_header
    %s9 = sphi 0, %s13
    %p10 = scmp.ge.s32.totalorder %s9, 4
    %s16 = sphi 0, %s28
    %s17 = sphi 0, %s24
    %s18 = sphi 0, %s16
    %s19 = sphi 0, %s17
    %s20 = sphi 0, %s18
    %s21 = sphi 0, %s19
    %s33 = sphi 0, %s35
    %s36 = sphi 0, %s33
    %s37 = sphi 0, %s36
    %s53 = sphi 0, %s37
    %s61 = sphi 0, %s63
    %s64 = sphi 0, %s61
    %s65 = sphi 0, %s64
    %s81 = sphi 0, %s65
    %s87 = sphi 0, %s89
    %s90 = sphi 0, %s87
    %s91 = sphi 0, %s90
    %s107 = sphi 0, %s91
    %s113 = sphi 0, %s115
    %s116 = sphi 0, %s113
    %s117 = sphi 0, %s116
    %s133 = sphi 0, %s117
  $region4: #{joints_mse_loss.1} parent=0 // loop_header_branch
    %12 = sbr.rel (%p10) target = $region8
  $region5: #{joints_mse_loss.1} parent=0 // loop_body
    %s14 = ssub.s32 %s9, 1
    %s15 = ssub.s32 %s9, 2
    %s22 = sadd.s32 1, %s17
    %p23 = scmp.ge.s32.totalorder %s22, 1
    %s24 = scalar_select %p23, 0, %s22
    %s25 = sadd.s32 1, %s16
    %s26 = scalar_select %p23, %s25, %s16
    %p27 = scmp.ge.s32.totalorder %s26, 2
    %s28 = scalar_select %p27, 0, %s26
    %s29 = ssub.s32 %s16, %s28
    %s30 = ssub.s32 %s17, %s24
    %s31 = sor.u32 %s29, %s30
    %p32 = scmp.eq.s32.totalorder %s31, 0
    %s34 = sadd.s32 %s33, 1
    %s35 = scalar_select %p32, %s33, %s34
    %p38 = pneg %p32
    %p39 = scmp.eq.s32.totalorder %s9, 1
    %p40 = por %p38, %p39
    %p41 = scmp.ne.s32.totalorder %s33, %s36
    %p42 = scmp.eq.s32.totalorder %s9, 0
    %p43 = por %p41, %p42
    %p44 = scmp.ne.s32.totalorder %s33, %s36
    %p45 = scmp.eq.s32.totalorder %s14, 1
    %p46 = por %p44, %p45
    %p47 = scmp.ne.s32.totalorder %s36, %s37
    %p48 = scmp.eq.s32.totalorder %s14, 0
    %p49 = por %p47, %p48
    %p50 = scmp.ne.s32.totalorder %s36, %s37
    %p51 = scmp.eq.s32.totalorder %s15, 1
    %p52 = por %p50, %p51
    %p54 = scmp.ne.s32.totalorder %s37, %s53
    %p55 = scmp.eq.s32.totalorder %s15, 0
    %p56 = por %p54, %p55
    %s57 = ssub.s32 %s16, %s28
    %s58 = ssub.s32 %s17, %s24
    %s59 = sor.u32 %s57, %s58
    %p60 = scmp.eq.s32.totalorder %s59, 0
    %s62 = sadd.s32 %s61, 1
    %s63 = scalar_select %p60, %s61, %s62
    %p66 = pneg %p60
    %p67 = scmp.eq.s32.totalorder %s9, 1
    %p68 = por %p66, %p67
    %p69 = scmp.ne.s32.totalorder %s61, %s64
    %p70 = scmp.eq.s32.totalorder %s9, 0
    %p71 = por %p69, %p70
    %p72 = scmp.ne.s32.totalorder %s61, %s64
    %p73 = scmp.eq.s32.totalorder %s14, 1
    %p74 = por %p72, %p73
    %p75 = scmp.ne.s32.totalorder %s64, %s65
    %p76 = scmp.eq.s32.totalorder %s14, 0
    %p77 = por %p75, %p76
    %p78 = scmp.ne.s32.totalorder %s64, %s65
    %p79 = scmp.eq.s32.totalorder %s15, 1
    %p80 = por %p78, %p79
    %p82 = scmp.ne.s32.totalorder %s65, %s81
    %p83 = scmp.eq.s32.totalorder %s15, 0
    %p84 = por %p82, %p83
    %s85 = ssub.s32 %s16, %s28
    %p86 = scmp.eq.s32.totalorder %s85, 0
    %s88 = sadd.s32 %s87, 1
    %s89 = scalar_select %p86, %s87, %s88
    %p92 = pneg %p86
    %p93 = scmp.eq.s32.totalorder %s9, 1
    %p94 = por %p92, %p93
    %p95 = scmp.ne.s32.totalorder %s87, %s90
    %p96 = scmp.eq.s32.totalorder %s9, 0
    %p97 = por %p95, %p96
    %p98 = scmp.ne.s32.totalorder %s87, %s90
    %p99 = scmp.eq.s32.totalorder %s14, 1
    %p100 = por %p98, %p99
    %p101 = scmp.ne.s32.totalorder %s90, %s91
    %p102 = scmp.eq.s32.totalorder %s14, 0
    %p103 = por %p101, %p102
    %p104 = scmp.ne.s32.totalorder %s90, %s91
    %p105 = scmp.eq.s32.totalorder %s15, 1
    %p106 = por %p104, %p105
    %p108 = scmp.ne.s32.totalorder %s91, %s107
    %p109 = scmp.eq.s32.totalorder %s15, 0
    %p110 = por %p108, %p109
    %s111 = ssub.s32 %s16, %s28
    %p112 = scmp.eq.s32.totalorder %s111, 0
    %s114 = sadd.s32 %s113, 1
    %s115 = scalar_select %p112, %s113, %s114
    %p118 = pneg %p112
    %p119 = scmp.eq.s32.totalorder %s9, 1
    %p120 = por %p118, %p119
    %p121 = scmp.ne.s32.totalorder %s113, %s116
    %p122 = scmp.eq.s32.totalorder %s9, 0
    %p123 = por %p121, %p122
    %p124 = scmp.ne.s32.totalorder %s113, %s116
    %p125 = scmp.eq.s32.totalorder %s14, 1
    %p126 = por %p124, %p125
    %p127 = scmp.ne.s32.totalorder %s116, %s117
    %p128 = scmp.eq.s32.totalorder %s14, 0
    %p129 = por %p127, %p128
    %p130 = scmp.ne.s32.totalorder %s116, %s117
    %p131 = scmp.eq.s32.totalorder %s15, 1
    %p132 = por %p130, %p131
    %p134 = scmp.ne.s32.totalorder %s117, %s133
    %p135 = scmp.eq.s32.totalorder %s15, 0
    %p136 = por %p134, %p135
    %p137 = scmp.le.s32.totalorder 1, %s9
    %p138 = scmp.lt.s32.totalorder %s9, 3
    %p139 = pnand %p137, %p138
    %p140 = pneg %p139
    // Predicated region
    $region9: #{joints_mse_loss.1} parent=5 // pred_check
      _
    $region10: #{joints_mse_loss.1} parent=5 // pred_check_branch
      %142 = sbr.rel (%p139) target = $region12
    $region11: #{joints_mse_loss.1} parent=5 // pred_region
      %s143 = ssub.s32 %s9, 1
    $region12: #{joints_mse_loss.1} parent=5 // pred_fallthru
      _
    %p144 = scmp.lt.s32.totalorder %s9, 2
    // Predicated region
    $region13: #{joints_mse_loss.1} parent=5 // pred_check
      %p145 = pneg %p144
    $region14: #{joints_mse_loss.1} parent=5 // pred_check_branch
      %147 = sbr.rel (%p145) target = $region16
    $region15: #{joints_mse_loss.1} parent=5 // pred_region
      // Predicated region
      $region17: #{joints_mse_loss.1} parent=15 // pred_check
        %p148 = pneg %p43
      $region18: #{joints_mse_loss.1} parent=15 // pred_check_branch
        %150 = sbr.rel (%p148) target = $region20
      $region19: #{joints_mse_loss.1} parent=15 // pred_region
        %s151 = smul.u32 2, %s17
        %p152 = scmp.lt.s32.totalorder %s16, 1
        %s153 = scalar_select %p152, %s16, 1
        %p154 = scmp.lt.s32.totalorder %s151, 1
        %s155 = scalar_select %p154, %s151, 1
        %s156 = smul.addr %s155, 2
        %s157 = smul.addr %s153, 4
        %s158 = sadd.s32 %s156, %s157
        %s159 = smul.addr %s158, 8
        %s160 = scalar_lea.vmem %s0, %s159
        %s161 = smul.u32 2, %s17
      $region20: #{joints_mse_loss.1} parent=15 // pred_fallthru
        _
      // Predicated region
      $region21: #{joints_mse_loss.1} parent=15 // pred_check
        %p162 = pneg %p71
      $region22: #{joints_mse_loss.1} parent=15 // pred_check_branch
        %164 = sbr.rel (%p162) target = $region24
      $region23: #{joints_mse_loss.1} parent=15 // pred_region
        %s165 = smul.u32 2, %s17
        %p166 = scmp.lt.s32.totalorder %s16, 1
        %s167 = scalar_select %p166, %s16, 1
        %p168 = scmp.lt.s32.totalorder %s165, 1
        %s169 = scalar_select %p168, %s165, 1
        %s170 = smul.addr %s169, 2
        %s171 = smul.addr %s167, 4
        %s172 = sadd.s32 %s170, %s171
        %s173 = smul.addr %s172, 8
        %s174 = scalar_lea.vmem %s1, %s173
        %s175 = smul.u32 2, %s17
      $region24: #{joints_mse_loss.1} parent=15 // pred_fallthru
        _
      // Predicated region
      $region25: #{joints_mse_loss.1} parent=15 // pred_check
        %p176 = pneg %p97
      $region26: #{joints_mse_loss.1} parent=15 // pred_check_branch
        %178 = sbr.rel (%p176) target = $region28
      $region27: #{joints_mse_loss.1} parent=15 // pred_region
        %p179 = scmp.lt.s32.totalorder %s16, 1
        %s180 = scalar_select %p179, %s16, 1
        %s181 = smul.addr %s180, 2
        %s182 = smul.addr %s181, 8
        %s183 = scalar_lea.vmem %s2, %s182
      $region28: #{joints_mse_loss.1} parent=15 // pred_fallthru
        _
    $region16: #{joints_mse_loss.1} parent=5 // pred_fallthru
      _
    %p184 = scmp.le.s32.totalorder 1, %s9
    %p185 = scmp.lt.s32.totalorder %s9, 3
    %p186 = pnand %p184, %p185
    %p187 = pneg %p186
    // Predicated region
    $region29: #{joints_mse_loss.1} parent=5 // pred_check
      _
    $region30: #{joints_mse_loss.1} parent=5 // pred_check_branch
      %189 = sbr.rel (%p186) target = $region32
    $region31: #{joints_mse_loss.1} parent=5 // pred_region
      %s190 = ssub.s32 %s9, 1
      %s191 = smul.u32 2, %s19
      %p192 = scmp.lt.s32.totalorder %s18, 1
      %s193 = scalar_select %p192, %s18, 1
      %p194 = scmp.lt.s32.totalorder %s191, 1
      %s195 = scalar_select %p194, %s191, 1
      %s196 = smul.addr %s195, 2
      %s197 = smul.addr %s193, 4
      %s198 = sadd.s32 %s196, %s197
      %s199 = smul.addr %s198, 8
      %s200 = scalar_lea.vmem %s0, %s199
      %p201 = pneg %p49
      %p202 = pneg %p46
      %s203 = smul.u32 2, %s19
      %p204 = scmp.lt.s32.totalorder %s18, 1
      %s205 = scalar_select %p204, %s18, 1
      %p206 = scmp.lt.s32.totalorder %s203, 1
      %s207 = scalar_select %p206, %s203, 1
      %s208 = smul.addr %s207, 2
      %s209 = smul.addr %s205, 4
      %s210 = sadd.s32 %s208, %s209
      %s211 = smul.addr %s210, 8
      %s212 = scalar_lea.vmem %s1, %s211
      %p213 = pneg %p77
      %p214 = pneg %p74
      %p215 = scmp.lt.s32.totalorder %s18, 1
      %s216 = scalar_select %p215, %s18, 1
      %s217 = smul.addr %s216, 2
      %s218 = smul.addr %s217, 8
      %s219 = scalar_lea.vmem %s2, %s218
      %p220 = pneg %p103
      %p221 = pneg %p100
      %p222 = pneg %p129
      %p223 = pneg %p126
      %p224 = scmp.lt.s32.totalorder %s18, 1
      %s225 = scalar_select %p224, %s18, 1
      %s226 = smul.addr %s225, 2
      %s227 = smul.addr %s226, 8
      %s228 = scalar_lea.vmem %s3, %s227
      %s229 = smul.u32 2, %s19
      %p230 = scmp.lt.s32.totalorder %s18, 1
      %s231 = scalar_select %p230, %s18, 1
      %p232 = scmp.lt.s32.totalorder %s229, 1
      %s233 = scalar_select %p232, %s229, 1
      %s234 = smul.addr %s233, 2
      %s235 = smul.addr %s231, 4
      %s236 = sadd.s32 %s234, %s235
      %s237 = smul.addr %s236, 8
      %s238 = scalar_lea.vmem %s0, %s237
      %s239 = smul.u32 2, %s19
      %s240 = smul.u32 2, %s19
      %p241 = scmp.lt.s32.totalorder %s18, 1
      %s242 = scalar_select %p241, %s18, 1
      %p243 = scmp.lt.s32.totalorder %s240, 1
      %s244 = scalar_select %p243, %s240, 1
      %s245 = smul.addr %s244, 2
      %s246 = smul.addr %s242, 4
      %s247 = sadd.s32 %s245, %s246
      %s248 = smul.addr %s247, 8
      %s249 = scalar_lea.vmem %s1, %s248
      %s250 = smul.u32 2, %s19
      %p251 = scmp.lt.s32.totalorder %s18, 1
      %s252 = scalar_select %p251, %s18, 1
      %s253 = smul.addr %s252, 2
      %s254 = smul.addr %s253, 8
      %s255 = scalar_lea.vmem %s2, %s254
      %p256 = scmp.lt.s32.totalorder %s18, 1
      %s257 = scalar_select %p256, %s18, 1
      %s258 = smul.addr %s257, 2
      %s259 = smul.addr %s258, 8
      %s260 = scalar_lea.vmem %s3, %s259
      %p261 = scmp.eq.s32.totalorder %s19, 0
      // Predicated region
      $region33: #{joints_mse_loss.1} parent=31 // pred_check
        %p262 = pneg %p261
      $region34: #{joints_mse_loss.1} parent=31 // pred_check_branch
        %264 = sbr.rel (%p262) target = $region36
      $region35: #{joints_mse_loss.1} parent=31 // pred_region
        %265 = vst [vmem:[%s260] sm:$0xff] 0.0
        %266 = vst [vmem:[%s260 + $0x8] sm:$0xff] 0.0
      $region36: #{joints_mse_loss.1} parent=31 // pred_fallthru
        _
      %v267 = vld [vmem:[%s238] sm:$0xff]
      %v268 = vld [vmem:[%s238 + $0x8] sm:$0xff]
      %v269 = vld [vmem:[%s238 + $0x10] sm:$0xff]
      %v270 = vld [vmem:[%s238 + $0x18] sm:$0xff]
      %v271 = vld [vmem:[%s249] sm:$0xff]
      %v272 = vld [vmem:[%s249 + $0x8] sm:$0xff]
      %v273 = vld [vmem:[%s249 + $0x10] sm:$0xff]
      %v274 = vld [vmem:[%s249 + $0x18] sm:$0xff]
      %v275 = vsub.f32 %v267, %v271
      %v276 = vsub.f32 %v268, %v272
      %v277 = vsub.f32 %v269, %v273
      %v278 = vsub.f32 %v270, %v274
      %v279 = vld [vmem:[%s255] sm:$0xff]
      %v280 = vld [vmem:[%s255 + $0x8] sm:$0xff]
      %282 = vset.pattern.permute.xlu0 0
      %283 = vperm.xlu0 %282, %v279
      %v284 = vpop.permute.xlu0 %283
      %287 = vset.pattern.permute.xlu0 0
      %288 = vperm.xlu0 %287, %v280
      %v289 = vpop.permute.xlu0 %288
      %v291 = vmul.f32 %v275, %v284
      %v292 = vmul.f32 %v276, %v284
      %v293 = vmul.f32 %v277, %v289
      %v294 = vmul.f32 %v278, %v289
      %v295 = vmul.f32 %v291, %v291
      %v296 = vmul.f32 %v292, %v292
      %v297 = vmul.f32 %v293, %v293
      %v298 = vmul.f32 %v294, %v294
      %v299 = vadd.f32 %v295, %v297
      %v300 = vadd.f32 %v296, %v298
      %v301 = vld [vmem:[%s260] sm:$0xff]
      %v302 = vld [vmem:[%s260 + $0x8] sm:$0xff]
      %v303 = vadd.f32 %v301, %v299
      %v304 = vadd.f32 %v302, %v300
      %305 = vst [vmem:[%s260] sm:$0xff] %v303
      %306 = vst [vmem:[%s260 + $0x8] sm:$0xff] %v304
      %p307 = scmp.lt.s32.totalorder %s18, 1
      %s308 = scalar_select %p307, %s18, 1
      %s309 = smul.addr %s308, 2
      %s310 = smul.addr %s309, 8
      %s311 = scalar_lea.vmem %s3, %s310
      // Predicated region
      $region37: #{joints_mse_loss.1} parent=31 // pred_check
        %p312 = pneg %p126
      $region38: #{joints_mse_loss.1} parent=31 // pred_check_branch
        %314 = sbr.rel (%p312) target = $region40
      $region39: #{joints_mse_loss.1} parent=31 // pred_region
        _
      $region40: #{joints_mse_loss.1} parent=31 // pred_fallthru
        _
    $region32: #{joints_mse_loss.1} parent=5 // pred_fallthru
      _
    %p315 = scmp.le.s32.totalorder 2, %s9
    // Predicated region
    $region41: #{joints_mse_loss.1} parent=5 // pred_check
      %p316 = pneg %p315
    $region42: #{joints_mse_loss.1} parent=5 // pred_check_branch
      %318 = sbr.rel (%p316) target = $region44
    $region43: #{joints_mse_loss.1} parent=5 // pred_region
      %s319 = ssub.s32 %s9, 2
      // Predicated region
      $region45: #{joints_mse_loss.1} parent=43 // pred_check
        %p320 = pneg %p132
      $region46: #{joints_mse_loss.1} parent=43 // pred_check_branch
        %322 = sbr.rel (%p320) target = $region48
      $region47: #{joints_mse_loss.1} parent=43 // pred_region
        %p323 = scmp.lt.s32.totalorder %s20, 1
        %s324 = scalar_select %p323, %s20, 1
        %s325 = smul.addr %s324, 2
        %s326 = smul.addr %s325, 8
        %s327 = scalar_lea.vmem %s3, %s326
      $region48: #{joints_mse_loss.1} parent=43 // pred_fallthru
        _
    $region44: #{joints_mse_loss.1} parent=5 // pred_fallthru
      _
  $region6: #{joints_mse_loss.1} parent=0 // loop_footer
    %s13 = sadd.s32 1, %s9
  $region7: #{joints_mse_loss.1} parent=0 // loop_footer_branch
    %8 = sbr.rel target = $region3
  $region8: #{joints_mse_loss.1} parent=0 // loop_exit
    _

</llo_original>
